<compile_context>
chip_gen: v6e
topology: v6e:2x2x1
jax: 0.10.0
libtpu: 0.0.40
codegen_flags: <defaults>
</compile_context>

<pallas_src>
import functools

import jax
import jax.numpy as jnp
from jax.experimental import pallas as pl
from jax.experimental.pallas import tpu as pltpu


def _round_up(x, mult):
    return ((x + mult - 1) // mult) * mult


def _visual_proj_kernel(x_ref, w1_ref, b1_ref, w2_ref, b2_ref, o_ref):
    """out = x + relu(x @ W1 + b1) @ W2 + b2 on one (tm, D) row tile.

    Matmuls use bf16 operands with f32 accumulation (MXU); bias add, ReLU and
    the residual add stay in f32 vregs; the residual uses the original x.
    """
    x = x_ref[...]

    # First linear + ReLU (bf16 operands, f32 accumulate on the MXU).
    h = jnp.dot(x.astype(jnp.bfloat16), w1_ref[...],
                preferred_element_type=jnp.float32)
    h = jnp.maximum(h + b1_ref[...], 0.0)          # (tm, H) + (1, H) broadcast

    # Second linear.
    y = jnp.dot(h.astype(jnp.bfloat16), w2_ref[...],
                preferred_element_type=jnp.float32)
    y = y + b2_ref[...]                            # (tm, D) + (1, D) broadcast

    # Residual connection in f32, single downcast at the end.
    o_ref[...] = (x.astype(jnp.float32) + y).astype(o_ref.dtype)


@functools.partial(jax.jit, static_argnames=("block_m",))
def visual_proj(x, w1, b1, w2, b2, *, block_m=1024):
    """Applies VisualProj to x of shape (..., D_in).

    w1: (D_in, H), b1: (H,), w2: (H, D_out), b2: (D_out,), D_in == D_out.
    """
    orig_shape = x.shape
    d_in, hdim = w1.shape
    d_out = w2.shape[1]
    assert orig_shape[-1] == d_in and d_in == d_out and w2.shape[0] == hdim

    x2 = x.reshape(-1, d_in)
    m = x2.shape[0]

    # --- pick the row tile (no padding; ragged last block handled by Pallas) --
    tm = max(8, min(int(block_m), _round_up(m, 8)))
    tm = _round_up(tm, 8)                   # sublane granularity is all we need
    grid_m = pl.cdiv(m, tm)
    # v7x shards the "parallel" grid axis across its 2 TensorCores: keep the
    # step count even when there is more than one step so neither core idles.
    if grid_m > 1 and grid_m % 2 == 1:
        grid_m += 1
        tm = _round_up(pl.cdiv(m, grid_m), 8)
        grid_m = pl.cdiv(m, tm)

    # Weights feed the MXU as bf16 (f32 accumulate); biases stay f32.
    w1_bf = w1.astype(jnp.bfloat16)
    w2_bf = w2.astype(jnp.bfloat16)
    b1_2d = b1.astype(jnp.float32).reshape(1, hdim)
    b2_2d = b2.astype(jnp.float32).reshape(1, d_out)

    itemsize = jnp.dtype(x.dtype).itemsize
    cost = pl.CostEstimate(
        flops=2 * m * (d_in * hdim + hdim * d_out),
        transcendentals=0,
        bytes_accessed=(m * (d_in + d_out) * itemsize
                        + (d_in * hdim + hdim * d_out) * 2
                        + (hdim + d_out) * 4),
    )

    out = pl.pallas_call(
        _visual_proj_kernel,
        out_shape=jax.ShapeDtypeStruct((m, d_out), x.dtype),
        grid_spec=pltpu.PrefetchScalarGridSpec(
            num_scalar_prefetch=0,
            grid=(grid_m,),
            in_specs=[
                pl.BlockSpec((tm, d_in), lambda i: (i, 0)),      # x row tile
                pl.BlockSpec((d_in, hdim), lambda i: (0, 0)),    # W1 (resident)
                pl.BlockSpec((1, hdim), lambda i: (0, 0)),       # b1
                pl.BlockSpec((hdim, d_out), lambda i: (0, 0)),   # W2 (resident)
                pl.BlockSpec((1, d_out), lambda i: (0, 0)),      # b2
            ],
            out_specs=pl.BlockSpec((tm, d_out), lambda i: (i, 0)),
        ),
        compiler_params=pltpu.CompilerParams(
            dimension_semantics=("parallel",),
            vmem_limit_bytes=48 * 1024 * 1024,
        ),
        cost_estimate=cost,
    )(x2, w1_bf, b1_2d, w2_bf, b2_2d)

    return out.reshape(orig_shape)


def init_params(key, input_size=256, hidden=512, output_size=256,
                dtype=jnp.float32):
    """Deterministic synthetic init (nn.Linear shapes; W stored as (in, out))."""
    k1, k2, k3, k4 = jax.random.split(key, 4)
    s1 = 1.0 / (input_size ** 0.5)
    s2 = 1.0 / (hidden ** 0.5)
    w1 = jax.random.uniform(k1, (input_size, hidden), dtype, -s1, s1)
    b1 = jax.random.uniform(k2, (hidden,), dtype, -s1, s1)
    w2 = jax.random.uniform(k3, (hidden, output_size), dtype, -s2, s2)
    b2 = jax.random.uniform(k4, (output_size,), dtype, -s2, s2)
    return w1, b1, w2, b2


if __name__ == "__main__":
    key = jax.random.PRNGKey(0)
    k_x, k_p = jax.random.split(key)

    # Small shapes consistent with the module: (batch=2, seq=8, features=256).
    batch, seq, d = 2, 8, 256
    x = jax.random.normal(k_x, (batch, seq, d), dtype=jnp.float32)
    w1, b1, w2, b2 = init_params(k_p, input_size=d, hidden=512, output_size=d)

    out = visual_proj(x, w1, b1, w2, b2)
    out = jax.block_until_ready(out)

    # Pure-JAX f32 reference (kernel uses bf16 MXU operands -> loose tolerance).
    ref = x + jnp.maximum(x @ w1 + b1, 0.0) @ w2 + b2
    assert out.shape == x.shape
    assert jnp.allclose(out, ref, atol=5e-2, rtol=5e-2), "mismatch vs reference"

    # Exercise the ragged (non-divisible) last-block path and multi-step grid
    # (even-grid heuristic) with a small forced tile.
    x2 = jax.random.normal(k_x, (3, 100, d), dtype=jnp.float32)
    out2 = jax.block_until_ready(visual_proj(x2, w1, b1, w2, b2, block_m=128))
    ref2 = x2 + jnp.maximum(x2 @ w1 + b1, 0.0) @ w2 + b2
    assert out2.shape == x2.shape
    assert jnp.allclose(out2, ref2, atol=5e-2, rtol=5e-2), "mismatch (ragged)"

    # And the default-tile path on the same ragged row count.
    out3 = jax.block_until_ready(visual_proj(x2, w1, b1, w2, b2))
    assert jnp.allclose(out3, ref2, atol=5e-2, rtol=5e-2), "mismatch (default)"

    print("KERNEL_OK")
</pallas_src>

<mosaic_0001>
module attributes {stable_mosaic.version = 11 : i64} {
  func.func @_visual_proj_kernel(%arg0: i32, %arg1: memref<16x256xf32, #tpu.memory_space<vmem>>, %arg2: memref<256x512xbf16, #tpu.memory_space<vmem>>, %arg3: memref<1x512xf32, #tpu.memory_space<vmem>>, %arg4: memref<512x256xbf16, #tpu.memory_space<vmem>>, %arg5: memref<1x256xf32, #tpu.memory_space<vmem>>, %arg6: memref<16x256xf32, #tpu.memory_space<vmem>>) attributes {dimension_semantics = [#tpu.dimension_semantics<parallel>], iteration_bounds = array<i64: 1>, scalar_prefetch = 0 : i64, scratch_operands = 0 : i64, tpu.core_type = #tpu.core_type<tc>, window_params = [{transform_indices = @transform_0, window_bounds = array<i64: 16, 256>}, {pipeline_mode = #tpu.pipeline_mode<synchronous>, transform_indices = @transform_1, window_bounds = array<i64: 256, 512>}, {pipeline_mode = #tpu.pipeline_mode<synchronous>, transform_indices = @transform_2, window_bounds = array<i64: 1, 512>}, {pipeline_mode = #tpu.pipeline_mode<synchronous>, transform_indices = @transform_3, window_bounds = array<i64: 512, 256>}, {pipeline_mode = #tpu.pipeline_mode<synchronous>, transform_indices = @transform_4, window_bounds = array<i64: 1, 256>}, {transform_indices = @transform_5, window_bounds = array<i64: 16, 256>}]} {
    %c0 = arith.constant 0 : index
    %c0_0 = arith.constant 0 : index
    %0 = vector.load %arg1[%c0, %c0_0] : memref<16x256xf32, #tpu.memory_space<vmem>>, vector<16x256xf32>
    %1 = arith.truncf %0 : vector<16x256xf32> to vector<16x256xbf16>
    %c0_1 = arith.constant 0 : index
    %c0_2 = arith.constant 0 : index
    %2 = vector.load %arg2[%c0_1, %c0_2] : memref<256x512xbf16, #tpu.memory_space<vmem>>, vector<256x512xbf16>
    %cst = arith.constant dense<0.000000e+00> : vector<16x512xf32>
    %3 = tpu.matmul %1, %2, %cst {dimension_numbers = #tpu.dot_dimension_numbers<[1], [0], [0], [1], [0, 0, 1, 1], [], []>} : vector<16x256xbf16>, vector<256x512xbf16>, vector<16x512xf32> -> vector<16x512xf32>
    %c0_3 = arith.constant 0 : index
    %c0_4 = arith.constant 0 : index
    %4 = vector.load %arg3[%c0_3, %c0_4] : memref<1x512xf32, #tpu.memory_space<vmem>>, vector<1x512xf32>
    %5 = vector.broadcast %4 : vector<1x512xf32> to vector<16x512xf32>
    %6 = arith.addf %3, %5 : vector<16x512xf32>
    %cst_5 = arith.constant 0.000000e+00 : f32
    %7 = vector.broadcast %cst_5 : f32 to vector<16x512xf32>
    %8 = arith.maximumf %6, %7 : vector<16x512xf32>
    %9 = arith.truncf %8 : vector<16x512xf32> to vector<16x512xbf16>
    %c0_6 = arith.constant 0 : index
    %c0_7 = arith.constant 0 : index
    %10 = vector.load %arg4[%c0_6, %c0_7] : memref<512x256xbf16, #tpu.memory_space<vmem>>, vector<512x256xbf16>
    %cst_8 = arith.constant dense<0.000000e+00> : vector<16x256xf32>
    %11 = tpu.matmul %9, %10, %cst_8 {dimension_numbers = #tpu.dot_dimension_numbers<[1], [0], [0], [1], [0, 0, 1, 1], [], []>} : vector<16x512xbf16>, vector<512x256xbf16>, vector<16x256xf32> -> vector<16x256xf32>
    %c0_9 = arith.constant 0 : index
    %c0_10 = arith.constant 0 : index
    %12 = vector.load %arg5[%c0_9, %c0_10] : memref<1x256xf32, #tpu.memory_space<vmem>>, vector<1x256xf32>
    %13 = vector.broadcast %12 : vector<1x256xf32> to vector<16x256xf32>
    %14 = arith.addf %11, %13 : vector<16x256xf32>
    %15 = arith.addf %0, %14 : vector<16x256xf32>
    %c0_11 = arith.constant 0 : index
    %c0_12 = arith.constant 0 : index
    %16 = vector.load %arg6[%c0_11, %c0_12] : memref<16x256xf32, #tpu.memory_space<vmem>>, vector<16x256xf32>
    tpu.vector_store %arg6[%c0_11, %c0_12], %15 {strides = array<i32>} : memref<16x256xf32, #tpu.memory_space<vmem>>, vector<16x256xf32>,
    return
  }
  func.func @transform_0(%arg0: i32) -> (i32, i32) {
    %c0_i32 = arith.constant 0 : i32
    %c0_i32_0 = arith.constant 0 : i32
    return %arg0, %c0_i32 : i32, i32
  }
  func.func @transform_1(%arg0: i32) -> (i32, i32) {
    %c0_i32 = arith.constant 0 : i32
    %c0_i32_0 = arith.constant 0 : i32
    %c0_i32_1 = arith.constant 0 : i32
    return %c0_i32, %c0_i32_0 : i32, i32
  }
  func.func @transform_2(%arg0: i32) -> (i32, i32) {
    %c0_i32 = arith.constant 0 : i32
    %c0_i32_0 = arith.constant 0 : i32
    %c0_i32_1 = arith.constant 0 : i32
    return %c0_i32, %c0_i32_0 : i32, i32
  }
  func.func @transform_3(%arg0: i32) -> (i32, i32) {
    %c0_i32 = arith.constant 0 : i32
    %c0_i32_0 = arith.constant 0 : i32
    %c0_i32_1 = arith.constant 0 : i32
    return %c0_i32, %c0_i32_0 : i32, i32
  }
  func.func @transform_4(%arg0: i32) -> (i32, i32) {
    %c0_i32 = arith.constant 0 : i32
    %c0_i32_0 = arith.constant 0 : i32
    %c0_i32_1 = arith.constant 0 : i32
    return %c0_i32, %c0_i32_0 : i32, i32
  }
  func.func @transform_5(%arg0: i32) -> (i32, i32) {
    %c0_i32 = arith.constant 0 : i32
    %c0_i32_0 = arith.constant 0 : i32
    return %arg0, %c0_i32 : i32, i32
  }
}

</mosaic_0001>

<llo_original>
// kernel: visual_proj.1
$region0: #{visual_proj.1}
  #allocation0 [shape = 'u32[]', space=smem, size = 0x4, offset = 0x4, fixed_abs, tag = 'smem constant byte address 0x4 - core index']
  #allocation1 [shape = 'u32[144,128]{1,0:T(1,128)}', space=vmem, size = 0x12000, scoped, tag = 'internal scratch']
  %s0 = inlined_call_operand.vmem [shape: f32[16,256], index: 0, kind: input, shape index: {}]
  %s1 = inlined_call_operand.vmem [shape: bf16[256,512], index: 1, kind: input, shape index: {}]
  %s2 = inlined_call_operand.vmem [shape: f32[1,512], index: 2, kind: input, shape index: {}]
  %s3 = inlined_call_operand.vmem [shape: bf16[512,256], index: 3, kind: input, shape index: {}]
  %s4 = inlined_call_operand.vmem [shape: f32[1,256], index: 4, kind: input, shape index: {}]
  %s5 = inlined_call_operand.hbm [shape: f32[16,256], index: 5, kind: output, shape index: {}]
  %s6 = sld [smem:[#allocation0]]
  $region30: #{visual_proj.1} parent=0
    _
  %s8 = ssub.s32 1, %s6
  %s9 = scalar_select 0, %s8, %s6
  $region1: #{visual_proj.1} parent=0
    #allocation2 [shape = 'u8[16384]{0}', space=vmem, size = 0x4000, scoped, tag = 'output window, operand 0, single buffered']
    #allocation3 [shape = 's32[1]{0}', space=sflag, size = 0x4, scoped, tag = 'scoped memory for visual_proj.1']
    %10 = vsyncpa [#allocation3], 0
    // Predicated region
    $region2: #{visual_proj.1} parent=1 // pred_check
      _
    $region3: #{visual_proj.1} parent=1 // pred_check_branch
      %12 = sbr.rel (0) target = $region5
    $region4: #{visual_proj.1} parent=1 // pred_region
      _
    $region5: #{visual_proj.1} parent=1 // pred_fallthru
      _
    // Predicated region
    $region6: #{visual_proj.1} parent=1 // pred_check
      _
    $region7: #{visual_proj.1} parent=1 // pred_check_branch
      %14 = sbr.rel (0) target = $region9
    $region8: #{visual_proj.1} parent=1 // pred_region
      _
    $region9: #{visual_proj.1} parent=1 // pred_fallthru
      _
    // Predicated region
    $region10: #{visual_proj.1} parent=1 // pred_check
      _
    $region11: #{visual_proj.1} parent=1 // pred_check_branch
      %16 = sbr.rel (0) target = $region13
    $region12: #{visual_proj.1} parent=1 // pred_region
      _
    $region13: #{visual_proj.1} parent=1 // pred_fallthru
      _
    // Predicated region
    $region14: #{visual_proj.1} parent=1 // pred_check
      _
    $region15: #{visual_proj.1} parent=1 // pred_check_branch
      %18 = sbr.rel (0) target = $region17
    $region16: #{visual_proj.1} parent=1 // pred_region
      _
    $region17: #{visual_proj.1} parent=1 // pred_fallthru
      _
    // Predicated region
    $region18: #{visual_proj.1} parent=1 // pred_check
      _
    $region19: #{visual_proj.1} parent=1 // pred_check_branch
      %20 = sbr.rel (0) target = $region21
    $region20: #{visual_proj.1} parent=1 // pred_region
      _
    $region21: #{visual_proj.1} parent=1 // pred_fallthru
      _
    %v21 = vld [vmem:[%s0] sm:$0xff]
    %v22 = vld [vmem:[%s0 + $0x8] sm:$0xff]
    %v23 = vld [vmem:[%s0 + $0x10] sm:$0xff]
    %v24 = vld [vmem:[%s0 + $0x18] sm:$0xff]
    %v25 = vpack.c.bf16 %v23, %v21
    %v26 = vpack.c.bf16 %v24, %v22
    %v27 = vld [vmem:[%s1] sm:$0xff]
    %v28 = vld [vmem:[%s1 + $0x8] sm:$0xff]
    %v29 = vld [vmem:[%s1 + $0x10] sm:$0xff]
    %v30 = vld [vmem:[%s1 + $0x18] sm:$0xff]
    %v31 = vld [vmem:[%s1 + $0x20] sm:$0xff]
    %v32 = vld [vmem:[%s1 + $0x28] sm:$0xff]
    %v33 = vld [vmem:[%s1 + $0x30] sm:$0xff]
    %v34 = vld [vmem:[%s1 + $0x38] sm:$0xff]
    %v35 = vld [vmem:[%s1 + $0x40] sm:$0xff]
    %v36 = vld [vmem:[%s1 + $0x48] sm:$0xff]
    %v37 = vld [vmem:[%s1 + $0x50] sm:$0xff]
    %v38 = vld [vmem:[%s1 + $0x58] sm:$0xff]
    %v39 = vld [vmem:[%s1 + $0x60] sm:$0xff]
    %v40 = vld [vmem:[%s1 + $0x68] sm:$0xff]
    %v41 = vld [vmem:[%s1 + $0x70] sm:$0xff]
    %v42 = vld [vmem:[%s1 + $0x78] sm:$0xff]
    %v43 = vld [vmem:[%s1 + $0x80] sm:$0xff]
    %v44 = vld [vmem:[%s1 + $0x88] sm:$0xff]
    %v45 = vld [vmem:[%s1 + $0x90] sm:$0xff]
    %v46 = vld [vmem:[%s1 + $0x98] sm:$0xff]
    %v47 = vld [vmem:[%s1 + $0xa0] sm:$0xff]
    %v48 = vld [vmem:[%s1 + $0xa8] sm:$0xff]
    %v49 = vld [vmem:[%s1 + $0xb0] sm:$0xff]
    %v50 = vld [vmem:[%s1 + $0xb8] sm:$0xff]
    %v51 = vld [vmem:[%s1 + $0xc0] sm:$0xff]
    %v52 = vld [vmem:[%s1 + $0xc8] sm:$0xff]
    %v53 = vld [vmem:[%s1 + $0xd0] sm:$0xff]
    %v54 = vld [vmem:[%s1 + $0xd8] sm:$0xff]
    %v55 = vld [vmem:[%s1 + $0xe0] sm:$0xff]
    %v56 = vld [vmem:[%s1 + $0xe8] sm:$0xff]
    %v57 = vld [vmem:[%s1 + $0xf0] sm:$0xff]
    %v58 = vld [vmem:[%s1 + $0xf8] sm:$0xff]
    %v59 = vld [vmem:[%s1 + $0x100] sm:$0xff]
    %v60 = vld [vmem:[%s1 + $0x108] sm:$0xff]
    %v61 = vld [vmem:[%s1 + $0x110] sm:$0xff]
    %v62 = vld [vmem:[%s1 + $0x118] sm:$0xff]
    %v63 = vld [vmem:[%s1 + $0x120] sm:$0xff]
    %v64 = vld [vmem:[%s1 + $0x128] sm:$0xff]
    %v65 = vld [vmem:[%s1 + $0x130] sm:$0xff]
    %v66 = vld [vmem:[%s1 + $0x138] sm:$0xff]
    %v67 = vld [vmem:[%s1 + $0x140] sm:$0xff]
    %v68 = vld [vmem:[%s1 + $0x148] sm:$0xff]
    %v69 = vld [vmem:[%s1 + $0x150] sm:$0xff]
    %v70 = vld [vmem:[%s1 + $0x158] sm:$0xff]
    %v71 = vld [vmem:[%s1 + $0x160] sm:$0xff]
    %v72 = vld [vmem:[%s1 + $0x168] sm:$0xff]
    %v73 = vld [vmem:[%s1 + $0x170] sm:$0xff]
    %v74 = vld [vmem:[%s1 + $0x178] sm:$0xff]
    %v75 = vld [vmem:[%s1 + $0x180] sm:$0xff]
    %v76 = vld [vmem:[%s1 + $0x188] sm:$0xff]
    %v77 = vld [vmem:[%s1 + $0x190] sm:$0xff]
    %v78 = vld [vmem:[%s1 + $0x198] sm:$0xff]
    %v79 = vld [vmem:[%s1 + $0x1a0] sm:$0xff]
    %v80 = vld [vmem:[%s1 + $0x1a8] sm:$0xff]
    %v81 = vld [vmem:[%s1 + $0x1b0] sm:$0xff]
    %v82 = vld [vmem:[%s1 + $0x1b8] sm:$0xff]
    %v83 = vld [vmem:[%s1 + $0x1c0] sm:$0xff]
    %v84 = vld [vmem:[%s1 + $0x1c8] sm:$0xff]
    %v85 = vld [vmem:[%s1 + $0x1d0] sm:$0xff]
    %v86 = vld [vmem:[%s1 + $0x1d8] sm:$0xff]
    %v87 = vld [vmem:[%s1 + $0x1e0] sm:$0xff]
    %v88 = vld [vmem:[%s1 + $0x1e8] sm:$0xff]
    %v89 = vld [vmem:[%s1 + $0x1f0] sm:$0xff]
    %v90 = vld [vmem:[%s1 + $0x1f8] sm:$0xff]
    %v91 = vld [vmem:[%s2] sm:$0xf]
    %v93 = vlaneseq
    %v94 = vshrl.u32 %v93, 7
    %v95 = vsub.s32 0, %v94
    %v96 = vrot.slane %v91, %v95
    %v97 = vlaneseq
    %v98 = vshrl.u32 %v97, 7
    %v99 = vsub.s32 1, %v98
    %v100 = vrot.slane %v91, %v99
    %v101 = vlaneseq
    %v102 = vshrl.u32 %v101, 7
    %v103 = vsub.s32 2, %v102
    %v104 = vrot.slane %v91, %v103
    %v105 = vlaneseq
    %v106 = vshrl.u32 %v105, 7
    %v107 = vsub.s32 3, %v106
    %v108 = vrot.slane %v91, %v107
    %v177 = vunpack.c.l.b16 %v27
    %v178 = vunpack.c.h.b16 %v27
    %v179 = vunpack.c.l.b16 %v28
    %v180 = vunpack.c.h.b16 %v28
    %v181 = vunpack.c.l.b16 %v29
    %v182 = vunpack.c.h.b16 %v29
    %v183 = vunpack.c.l.b16 %v30
    %v184 = vunpack.c.h.b16 %v30
    %v185 = vunpack.c.l.b16 %v31
    %v186 = vunpack.c.h.b16 %v31
    %v187 = vunpack.c.l.b16 %v32
    %v188 = vunpack.c.h.b16 %v32
    %v189 = vunpack.c.l.b16 %v33
    %v190 = vunpack.c.h.b16 %v33
    %v191 = vunpack.c.l.b16 %v34
    %v192 = vunpack.c.h.b16 %v34
    %v193 = vunpack.c.l.b16 %v35
    %v194 = vunpack.c.h.b16 %v35
    %v195 = vunpack.c.l.b16 %v36
    %v196 = vunpack.c.h.b16 %v36
    %v197 = vunpack.c.l.b16 %v37
    %v198 = vunpack.c.h.b16 %v37
    %v199 = vunpack.c.l.b16 %v38
    %v200 = vunpack.c.h.b16 %v38
    %v201 = vunpack.c.l.b16 %v39
    %v202 = vunpack.c.h.b16 %v39
    %v203 = vunpack.c.l.b16 %v40
    %v204 = vunpack.c.h.b16 %v40
    %v205 = vunpack.c.l.b16 %v41
    %v206 = vunpack.c.h.b16 %v41
    %v207 = vunpack.c.l.b16 %v42
    %v208 = vunpack.c.h.b16 %v42
    %v209 = vunpack.c.l.b16 %v43
    %v210 = vunpack.c.h.b16 %v43
    %v211 = vunpack.c.l.b16 %v44
    %v212 = vunpack.c.h.b16 %v44
    %v213 = vunpack.c.l.b16 %v45
    %v214 = vunpack.c.h.b16 %v45
    %v215 = vunpack.c.l.b16 %v46
    %v216 = vunpack.c.h.b16 %v46
    %v217 = vunpack.c.l.b16 %v47
    %v218 = vunpack.c.h.b16 %v47
    %v219 = vunpack.c.l.b16 %v48
    %v220 = vunpack.c.h.b16 %v48
    %v221 = vunpack.c.l.b16 %v49
    %v222 = vunpack.c.h.b16 %v49
    %v223 = vunpack.c.l.b16 %v50
    %v224 = vunpack.c.h.b16 %v50
    %v225 = vunpack.c.l.b16 %v51
    %v226 = vunpack.c.h.b16 %v51
    %v227 = vunpack.c.l.b16 %v52
    %v228 = vunpack.c.h.b16 %v52
    %v229 = vunpack.c.l.b16 %v53
    %v230 = vunpack.c.h.b16 %v53
    %v231 = vunpack.c.l.b16 %v54
    %v232 = vunpack.c.h.b16 %v54
    %v233 = vunpack.c.l.b16 %v55
    %v234 = vunpack.c.h.b16 %v55
    %v235 = vunpack.c.l.b16 %v56
    %v236 = vunpack.c.h.b16 %v56
    %v237 = vunpack.c.l.b16 %v57
    %v238 = vunpack.c.h.b16 %v57
    %v239 = vunpack.c.l.b16 %v58
    %v240 = vunpack.c.h.b16 %v58
    %v241 = vunpack.c.l.b16 %v59
    %v242 = vunpack.c.h.b16 %v59
    %v243 = vunpack.c.l.b16 %v60
    %v244 = vunpack.c.h.b16 %v60
    %v245 = vunpack.c.l.b16 %v61
    %v246 = vunpack.c.h.b16 %v61
    %v247 = vunpack.c.l.b16 %v62
    %v248 = vunpack.c.h.b16 %v62
    %v249 = vunpack.c.l.b16 %v63
    %v250 = vunpack.c.h.b16 %v63
    %v251 = vunpack.c.l.b16 %v64
    %v252 = vunpack.c.h.b16 %v64
    %v253 = vunpack.c.l.b16 %v65
    %v254 = vunpack.c.h.b16 %v65
    %v255 = vunpack.c.l.b16 %v66
    %v256 = vunpack.c.h.b16 %v66
    %v257 = vunpack.c.l.b16 %v67
    %v258 = vunpack.c.h.b16 %v67
    %v259 = vunpack.c.l.b16 %v68
    %v260 = vunpack.c.h.b16 %v68
    %v261 = vunpack.c.l.b16 %v69
    %v262 = vunpack.c.h.b16 %v69
    %v263 = vunpack.c.l.b16 %v70
    %v264 = vunpack.c.h.b16 %v70
    %v265 = vunpack.c.l.b16 %v71
    %v266 = vunpack.c.h.b16 %v71
    %v267 = vunpack.c.l.b16 %v72
    %v268 = vunpack.c.h.b16 %v72
    %v269 = vunpack.c.l.b16 %v73
    %v270 = vunpack.c.h.b16 %v73
    %v271 = vunpack.c.l.b16 %v74
    %v272 = vunpack.c.h.b16 %v74
    %v273 = vunpack.c.l.b16 %v75
    %v274 = vunpack.c.h.b16 %v75
    %v275 = vunpack.c.l.b16 %v76
    %v276 = vunpack.c.h.b16 %v76
    %v277 = vunpack.c.l.b16 %v77
    %v278 = vunpack.c.h.b16 %v77
    %v279 = vunpack.c.l.b16 %v78
    %v280 = vunpack.c.h.b16 %v78
    %v281 = vunpack.c.l.b16 %v79
    %v282 = vunpack.c.h.b16 %v79
    %v283 = vunpack.c.l.b16 %v80
    %v284 = vunpack.c.h.b16 %v80
    %v285 = vunpack.c.l.b16 %v81
    %v286 = vunpack.c.h.b16 %v81
    %v287 = vunpack.c.l.b16 %v82
    %v288 = vunpack.c.h.b16 %v82
    %v289 = vunpack.c.l.b16 %v83
    %v290 = vunpack.c.h.b16 %v83
    %v291 = vunpack.c.l.b16 %v84
    %v292 = vunpack.c.h.b16 %v84
    %v293 = vunpack.c.l.b16 %v85
    %v294 = vunpack.c.h.b16 %v85
    %v295 = vunpack.c.l.b16 %v86
    %v296 = vunpack.c.h.b16 %v86
    %v297 = vunpack.c.l.b16 %v87
    %v298 = vunpack.c.h.b16 %v87
    %v299 = vunpack.c.l.b16 %v88
    %v300 = vunpack.c.h.b16 %v88
    %v301 = vunpack.c.l.b16 %v89
    %v302 = vunpack.c.h.b16 %v89
    %v303 = vunpack.c.l.b16 %v90
    %v304 = vunpack.c.h.b16 %v90
    %v305 = vpack.c.b16 %v181, %v177
    %v306 = vpack.c.b16 %v182, %v178
    %v307 = vpack.c.b16 %v183, %v179
    %v308 = vpack.c.b16 %v184, %v180
    %v309 = vpack.c.b16 %v189, %v185
    %v310 = vpack.c.b16 %v190, %v186
    %v311 = vpack.c.b16 %v191, %v187
    %v312 = vpack.c.b16 %v192, %v188
    %v313 = vpack.c.b16 %v197, %v193
    %v314 = vpack.c.b16 %v198, %v194
    %v315 = vpack.c.b16 %v199, %v195
    %v316 = vpack.c.b16 %v200, %v196
    %v317 = vpack.c.b16 %v205, %v201
    %v318 = vpack.c.b16 %v206, %v202
    %v319 = vpack.c.b16 %v207, %v203
    %v320 = vpack.c.b16 %v208, %v204
    %v321 = vpack.c.b16 %v213, %v209
    %v322 = vpack.c.b16 %v214, %v210
    %v323 = vpack.c.b16 %v215, %v211
    %v324 = vpack.c.b16 %v216, %v212
    %v325 = vpack.c.b16 %v221, %v217
    %v326 = vpack.c.b16 %v222, %v218
    %v327 = vpack.c.b16 %v223, %v219
    %v328 = vpack.c.b16 %v224, %v220
    %v329 = vpack.c.b16 %v229, %v225
    %v330 = vpack.c.b16 %v230, %v226
    %v331 = vpack.c.b16 %v231, %v227
    %v332 = vpack.c.b16 %v232, %v228
    %v333 = vpack.c.b16 %v237, %v233
    %v334 = vpack.c.b16 %v238, %v234
    %v335 = vpack.c.b16 %v239, %v235
    %v336 = vpack.c.b16 %v240, %v236
    %v337 = vpack.c.b16 %v245, %v241
    %v338 = vpack.c.b16 %v246, %v242
    %v339 = vpack.c.b16 %v247, %v243
    %v340 = vpack.c.b16 %v248, %v244
    %v341 = vpack.c.b16 %v253, %v249
    %v342 = vpack.c.b16 %v254, %v250
    %v343 = vpack.c.b16 %v255, %v251
    %v344 = vpack.c.b16 %v256, %v252
    %v345 = vpack.c.b16 %v261, %v257
    %v346 = vpack.c.b16 %v262, %v258
    %v347 = vpack.c.b16 %v263, %v259
    %v348 = vpack.c.b16 %v264, %v260
    %v349 = vpack.c.b16 %v269, %v265
    %v350 = vpack.c.b16 %v270, %v266
    %v351 = vpack.c.b16 %v271, %v267
    %v352 = vpack.c.b16 %v272, %v268
    %v353 = vpack.c.b16 %v277, %v273
    %v354 = vpack.c.b16 %v278, %v274
    %v355 = vpack.c.b16 %v279, %v275
    %v356 = vpack.c.b16 %v280, %v276
    %v357 = vpack.c.b16 %v285, %v281
    %v358 = vpack.c.b16 %v286, %v282
    %v359 = vpack.c.b16 %v287, %v283
    %v360 = vpack.c.b16 %v288, %v284
    %v361 = vpack.c.b16 %v293, %v289
    %v362 = vpack.c.b16 %v294, %v290
    %v363 = vpack.c.b16 %v295, %v291
    %v364 = vpack.c.b16 %v296, %v292
    %v365 = vpack.c.b16 %v301, %v297
    %v366 = vpack.c.b16 %v302, %v298
    %v367 = vpack.c.b16 %v303, %v299
    %v368 = vpack.c.b16 %v304, %v300
    %433 = vmatprep.subr.bf16.mxu0 %v334
    %434 = vmatpush1.bf16.msra.mxu0 %v333
    %435 = vmatprep.subr.bf16.mxu0 %v330
    %436 = vmatpush1.bf16.msra.mxu0 %v329
    %437 = vmatprep.subr.bf16.mxu0 %v326
    %438 = vmatpush1.bf16.msra.mxu0 %v325
    %439 = vmatprep.subr.bf16.mxu0 %v322
    %440 = vmatpush1.bf16.msra.mxu0 %v321
    %441 = vmatprep.subr.bf16.mxu0 %v318
    %442 = vmatpush1.bf16.msra.mxu0 %v317
    %443 = vmatprep.subr.bf16.mxu0 %v314
    %444 = vmatpush1.bf16.msra.mxu0 %v313
    %445 = vmatprep.subr.bf16.mxu0 %v310
    %446 = vmatpush1.bf16.msra.mxu0 %v309
    %447 = vmatprep.subr.bf16.mxu0 %v306
    %448 = vmatpush1.bf16.msra.mxu0 %v305
    %449 = vmatprep.subr.bf16.mxu0 %v366
    %450 = vmatpush2.bf16.msra.mxu0 %v365
    %451 = vmatprep.subr.bf16.mxu0 %v362
    %452 = vmatpush2.bf16.msra.mxu0 %v361
    %453 = vmatprep.subr.bf16.mxu0 %v358
    %454 = vmatpush2.bf16.msra.mxu0 %v357
    %455 = vmatprep.subr.bf16.mxu0 %v354
    %456 = vmatpush2.bf16.msra.mxu0 %v353
    %457 = vmatprep.subr.bf16.mxu0 %v350
    %458 = vmatpush2.bf16.msra.mxu0 %v349
    %459 = vmatprep.subr.bf16.mxu0 %v346
    %460 = vmatpush2.bf16.msra.mxu0 %v345
    %461 = vmatprep.subr.bf16.mxu0 %v342
    %462 = vmatpush2.bf16.msra.mxu0 %v341
    %463 = vmatprep.subr.bf16.mxu0 %v338
    %464 = vmatpush2.bf16.msra.mxu0 %v337
    %465 = vmatprep.mubr.bf16.mxu0 %v26
    %466 = vmatmul.mubr.bf16.gmra.mxu0 %v25
    %v467 = vpop.f32.mrf.mxu0
    %v468 = vadd.f32 %v96, %v467
    %v469 = vpop.f32.mrf.mxu0
    %v470 = vadd.f32 %v100, %v469
    %v471 = vpop.f32.mrf.mxu0
    %v472 = vadd.f32 %v96, %v471
    %v473 = vpop.f32.mrf.mxu0
    %v474 = vadd.f32 %v100, %v473
    %475 = vdwg.mxu0
    %476 = vmatprep.subr.bf16.mxu0 %v336
    %477 = vmatpush1.bf16.msra.mxu0 %v335
    %478 = vmatprep.subr.bf16.mxu0 %v332
    %479 = vmatpush1.bf16.msra.mxu0 %v331
    %480 = vmatprep.subr.bf16.mxu0 %v328
    %481 = vmatpush1.bf16.msra.mxu0 %v327
    %482 = vmatprep.subr.bf16.mxu0 %v324
    %483 = vmatpush1.bf16.msra.mxu0 %v323
    %484 = vmatprep.subr.bf16.mxu0 %v320
    %485 = vmatpush1.bf16.msra.mxu0 %v319
    %486 = vmatprep.subr.bf16.mxu0 %v316
    %487 = vmatpush1.bf16.msra.mxu0 %v315
    %488 = vmatprep.subr.bf16.mxu0 %v312
    %489 = vmatpush1.bf16.msra.mxu0 %v311
    %490 = vmatprep.subr.bf16.mxu0 %v308
    %491 = vmatpush1.bf16.msra.mxu0 %v307
    %492 = vmatprep.subr.bf16.mxu0 %v368
    %493 = vmatpush2.bf16.msra.mxu0 %v367
    %494 = vmatprep.subr.bf16.mxu0 %v364
    %495 = vmatpush2.bf16.msra.mxu0 %v363
    %496 = vmatprep.subr.bf16.mxu0 %v360
    %497 = vmatpush2.bf16.msra.mxu0 %v359
    %498 = vmatprep.subr.bf16.mxu0 %v356
    %499 = vmatpush2.bf16.msra.mxu0 %v355
    %500 = vmatprep.subr.bf16.mxu0 %v352
    %501 = vmatpush2.bf16.msra.mxu0 %v351
    %502 = vmatprep.subr.bf16.mxu0 %v348
    %503 = vmatpush2.bf16.msra.mxu0 %v347
    %504 = vmatprep.subr.bf16.mxu0 %v344
    %505 = vmatpush2.bf16.msra.mxu0 %v343
    %506 = vmatprep.subr.bf16.mxu0 %v340
    %507 = vmatpush2.bf16.msra.mxu0 %v339
    %508 = vmatprep.mubr.bf16.mxu0 %v26
    %509 = vmatmul.mubr.bf16.gmra.mxu0 %v25
    %v510 = vpop.f32.mrf.mxu0
    %v511 = vadd.f32 %v104, %v510
    %v512 = vpop.f32.mrf.mxu0
    %v513 = vadd.f32 %v108, %v512
    %v514 = vpop.f32.mrf.mxu0
    %v515 = vadd.f32 %v104, %v514
    %v516 = vpop.f32.mrf.mxu0
    %v517 = vadd.f32 %v108, %v516
    %518 = vdwg.mxu0
    %v519 = vmax.f32 %v468, 0.0
    %v520 = vmax.f32 %v470, 0.0
    %v521 = vmax.f32 %v511, 0.0
    %v522 = vmax.f32 %v513, 0.0
    %v523 = vmax.f32 %v472, 0.0
    %v524 = vmax.f32 %v474, 0.0
    %v525 = vmax.f32 %v515, 0.0
    %v526 = vmax.f32 %v517, 0.0
    %v527 = vpack.c.bf16 %v523, %v519
    %v528 = vpack.c.bf16 %v524, %v520
    %v529 = vpack.c.bf16 %v525, %v521
    %v530 = vpack.c.bf16 %v526, %v522
    %v531 = vld [vmem:[%s3] sm:$0xff]
    %v532 = vld [vmem:[%s3 + $0x8] sm:$0xff]
    %v533 = vld [vmem:[%s3 + $0x10] sm:$0xff]
    %v534 = vld [vmem:[%s3 + $0x18] sm:$0xff]
    %v535 = vld [vmem:[%s3 + $0x20] sm:$0xff]
    %v536 = vld [vmem:[%s3 + $0x28] sm:$0xff]
    %v537 = vld [vmem:[%s3 + $0x30] sm:$0xff]
    %v538 = vld [vmem:[%s3 + $0x38] sm:$0xff]
    %v539 = vld [vmem:[%s3 + $0x40] sm:$0xff]
    %v540 = vld [vmem:[%s3 + $0x48] sm:$0xff]
    %v541 = vld [vmem:[%s3 + $0x50] sm:$0xff]
    %v542 = vld [vmem:[%s3 + $0x58] sm:$0xff]
    %v543 = vld [vmem:[%s3 + $0x60] sm:$0xff]
    %v544 = vld [vmem:[%s3 + $0x68] sm:$0xff]
    %v545 = vld [vmem:[%s3 + $0x70] sm:$0xff]
    %v546 = vld [vmem:[%s3 + $0x78] sm:$0xff]
    %v547 = vld [vmem:[%s3 + $0x80] sm:$0xff]
    %v548 = vld [vmem:[%s3 + $0x88] sm:$0xff]
    %v549 = vld [vmem:[%s3 + $0x90] sm:$0xff]
    %v550 = vld [vmem:[%s3 + $0x98] sm:$0xff]
    %v551 = vld [vmem:[%s3 + $0xa0] sm:$0xff]
    %v552 = vld [vmem:[%s3 + $0xa8] sm:$0xff]
    %v553 = vld [vmem:[%s3 + $0xb0] sm:$0xff]
    %v554 = vld [vmem:[%s3 + $0xb8] sm:$0xff]
    %v555 = vld [vmem:[%s3 + $0xc0] sm:$0xff]
    %v556 = vld [vmem:[%s3 + $0xc8] sm:$0xff]
    %v557 = vld [vmem:[%s3 + $0xd0] sm:$0xff]
    %v558 = vld [vmem:[%s3 + $0xd8] sm:$0xff]
    %v559 = vld [vmem:[%s3 + $0xe0] sm:$0xff]
    %v560 = vld [vmem:[%s3 + $0xe8] sm:$0xff]
    %v561 = vld [vmem:[%s3 + $0xf0] sm:$0xff]
    %v562 = vld [vmem:[%s3 + $0xf8] sm:$0xff]
    %v563 = vld [vmem:[%s3 + $0x100] sm:$0xff]
    %v564 = vld [vmem:[%s3 + $0x108] sm:$0xff]
    %v565 = vld [vmem:[%s3 + $0x110] sm:$0xff]
    %v566 = vld [vmem:[%s3 + $0x118] sm:$0xff]
    %v567 = vld [vmem:[%s3 + $0x120] sm:$0xff]
    %v568 = vld [vmem:[%s3 + $0x128] sm:$0xff]
    %v569 = vld [vmem:[%s3 + $0x130] sm:$0xff]
    %v570 = vld [vmem:[%s3 + $0x138] sm:$0xff]
    %v571 = vld [vmem:[%s3 + $0x140] sm:$0xff]
    %v572 = vld [vmem:[%s3 + $0x148] sm:$0xff]
    %v573 = vld [vmem:[%s3 + $0x150] sm:$0xff]
    %v574 = vld [vmem:[%s3 + $0x158] sm:$0xff]
    %v575 = vld [vmem:[%s3 + $0x160] sm:$0xff]
    %v576 = vld [vmem:[%s3 + $0x168] sm:$0xff]
    %v577 = vld [vmem:[%s3 + $0x170] sm:$0xff]
    %v578 = vld [vmem:[%s3 + $0x178] sm:$0xff]
    %v579 = vld [vmem:[%s3 + $0x180] sm:$0xff]
    %v580 = vld [vmem:[%s3 + $0x188] sm:$0xff]
    %v581 = vld [vmem:[%s3 + $0x190] sm:$0xff]
    %v582 = vld [vmem:[%s3 + $0x198] sm:$0xff]
    %v583 = vld [vmem:[%s3 + $0x1a0] sm:$0xff]
    %v584 = vld [vmem:[%s3 + $0x1a8] sm:$0xff]
    %v585 = vld [vmem:[%s3 + $0x1b0] sm:$0xff]
    %v586 = vld [vmem:[%s3 + $0x1b8] sm:$0xff]
    %v587 = vld [vmem:[%s3 + $0x1c0] sm:$0xff]
    %v588 = vld [vmem:[%s3 + $0x1c8] sm:$0xff]
    %v589 = vld [vmem:[%s3 + $0x1d0] sm:$0xff]
    %v590 = vld [vmem:[%s3 + $0x1d8] sm:$0xff]
    %v591 = vld [vmem:[%s3 + $0x1e0] sm:$0xff]
    %v592 = vld [vmem:[%s3 + $0x1e8] sm:$0xff]
    %v593 = vld [vmem:[%s3 + $0x1f0] sm:$0xff]
    %v594 = vld [vmem:[%s3 + $0x1f8] sm:$0xff]
    %v595 = vld [vmem:[%s4] sm:$0x3]
    %v597 = vlaneseq
    %v598 = vshrl.u32 %v597, 7
    %v599 = vsub.s32 0, %v598
    %v600 = vrot.slane %v595, %v599
    %v601 = vlaneseq
    %v602 = vshrl.u32 %v601, 7
    %v603 = vsub.s32 1, %v602
    %v604 = vrot.slane %v595, %v603
    %v671 = vunpack.c.l.b16 %v531
    %v672 = vunpack.c.h.b16 %v531
    %v673 = vunpack.c.l.b16 %v532
    %v674 = vunpack.c.h.b16 %v532
    %v675 = vunpack.c.l.b16 %v533
    %v676 = vunpack.c.h.b16 %v533
    %v677 = vunpack.c.l.b16 %v534
    %v678 = vunpack.c.h.b16 %v534
    %v679 = vunpack.c.l.b16 %v535
    %v680 = vunpack.c.h.b16 %v535
    %v681 = vunpack.c.l.b16 %v536
    %v682 = vunpack.c.h.b16 %v536
    %v683 = vunpack.c.l.b16 %v537
    %v684 = vunpack.c.h.b16 %v537
    %v685 = vunpack.c.l.b16 %v538
    %v686 = vunpack.c.h.b16 %v538
    %v687 = vunpack.c.l.b16 %v539
    %v688 = vunpack.c.h.b16 %v539
    %v689 = vunpack.c.l.b16 %v540
    %v690 = vunpack.c.h.b16 %v540
    %v691 = vunpack.c.l.b16 %v541
    %v692 = vunpack.c.h.b16 %v541
    %v693 = vunpack.c.l.b16 %v542
    %v694 = vunpack.c.h.b16 %v542
    %v695 = vunpack.c.l.b16 %v543
    %v696 = vunpack.c.h.b16 %v543
    %v697 = vunpack.c.l.b16 %v544
    %v698 = vunpack.c.h.b16 %v544
    %v699 = vunpack.c.l.b16 %v545
    %v700 = vunpack.c.h.b16 %v545
    %v701 = vunpack.c.l.b16 %v546
    %v702 = vunpack.c.h.b16 %v546
    %v703 = vunpack.c.l.b16 %v547
    %v704 = vunpack.c.h.b16 %v547
    %v705 = vunpack.c.l.b16 %v548
    %v706 = vunpack.c.h.b16 %v548
    %v707 = vunpack.c.l.b16 %v549
    %v708 = vunpack.c.h.b16 %v549
    %v709 = vunpack.c.l.b16 %v550
    %v710 = vunpack.c.h.b16 %v550
    %v711 = vunpack.c.l.b16 %v551
    %v712 = vunpack.c.h.b16 %v551
    %v713 = vunpack.c.l.b16 %v552
    %v714 = vunpack.c.h.b16 %v552
    %v715 = vunpack.c.l.b16 %v553
    %v716 = vunpack.c.h.b16 %v553
    %v717 = vunpack.c.l.b16 %v554
    %v718 = vunpack.c.h.b16 %v554
    %v719 = vunpack.c.l.b16 %v555
    %v720 = vunpack.c.h.b16 %v555
    %v721 = vunpack.c.l.b16 %v556
    %v722 = vunpack.c.h.b16 %v556
    %v723 = vunpack.c.l.b16 %v557
    %v724 = vunpack.c.h.b16 %v557
    %v725 = vunpack.c.l.b16 %v558
    %v726 = vunpack.c.h.b16 %v558
    %v727 = vunpack.c.l.b16 %v559
    %v728 = vunpack.c.h.b16 %v559
    %v729 = vunpack.c.l.b16 %v560
    %v730 = vunpack.c.h.b16 %v560
    %v731 = vunpack.c.l.b16 %v561
    %v732 = vunpack.c.h.b16 %v561
    %v733 = vunpack.c.l.b16 %v562
    %v734 = vunpack.c.h.b16 %v562
    %v735 = vunpack.c.l.b16 %v563
    %v736 = vunpack.c.h.b16 %v563
    %v737 = vunpack.c.l.b16 %v564
    %v738 = vunpack.c.h.b16 %v564
    %v739 = vunpack.c.l.b16 %v565
    %v740 = vunpack.c.h.b16 %v565
    %v741 = vunpack.c.l.b16 %v566
    %v742 = vunpack.c.h.b16 %v566
    %v743 = vunpack.c.l.b16 %v567
    %v744 = vunpack.c.h.b16 %v567
    %v745 = vunpack.c.l.b16 %v568
    %v746 = vunpack.c.h.b16 %v568
    %v747 = vunpack.c.l.b16 %v569
    %v748 = vunpack.c.h.b16 %v569
    %v749 = vunpack.c.l.b16 %v570
    %v750 = vunpack.c.h.b16 %v570
    %v751 = vunpack.c.l.b16 %v571
    %v752 = vunpack.c.h.b16 %v571
    %v753 = vunpack.c.l.b16 %v572
    %v754 = vunpack.c.h.b16 %v572
    %v755 = vunpack.c.l.b16 %v573
    %v756 = vunpack.c.h.b16 %v573
    %v757 = vunpack.c.l.b16 %v574
    %v758 = vunpack.c.h.b16 %v574
    %v759 = vunpack.c.l.b16 %v575
    %v760 = vunpack.c.h.b16 %v575
    %v761 = vunpack.c.l.b16 %v576
    %v762 = vunpack.c.h.b16 %v576
    %v763 = vunpack.c.l.b16 %v577
    %v764 = vunpack.c.h.b16 %v577
    %v765 = vunpack.c.l.b16 %v578
    %v766 = vunpack.c.h.b16 %v578
    %v767 = vunpack.c.l.b16 %v579
    %v768 = vunpack.c.h.b16 %v579
    %v769 = vunpack.c.l.b16 %v580
    %v770 = vunpack.c.h.b16 %v580
    %v771 = vunpack.c.l.b16 %v581
    %v772 = vunpack.c.h.b16 %v581
    %v773 = vunpack.c.l.b16 %v582
    %v774 = vunpack.c.h.b16 %v582
    %v775 = vunpack.c.l.b16 %v583
    %v776 = vunpack.c.h.b16 %v583
    %v777 = vunpack.c.l.b16 %v584
    %v778 = vunpack.c.h.b16 %v584
    %v779 = vunpack.c.l.b16 %v585
    %v780 = vunpack.c.h.b16 %v585
    %v781 = vunpack.c.l.b16 %v586
    %v782 = vunpack.c.h.b16 %v586
    %v783 = vunpack.c.l.b16 %v587
    %v784 = vunpack.c.h.b16 %v587
    %v785 = vunpack.c.l.b16 %v588
    %v786 = vunpack.c.h.b16 %v588
    %v787 = vunpack.c.l.b16 %v589
    %v788 = vunpack.c.h.b16 %v589
    %v789 = vunpack.c.l.b16 %v590
    %v790 = vunpack.c.h.b16 %v590
    %v791 = vunpack.c.l.b16 %v591
    %v792 = vunpack.c.h.b16 %v591
    %v793 = vunpack.c.l.b16 %v592
    %v794 = vunpack.c.h.b16 %v592
    %v795 = vunpack.c.l.b16 %v593
    %v796 = vunpack.c.h.b16 %v593
    %v797 = vunpack.c.l.b16 %v594
    %v798 = vunpack.c.h.b16 %v594
    %v799 = vpack.c.b16 %v673, %v671
    %v800 = vpack.c.b16 %v674, %v672
    %v801 = vpack.c.b16 %v677, %v675
    %v802 = vpack.c.b16 %v678, %v676
    %v803 = vpack.c.b16 %v681, %v679
    %v804 = vpack.c.b16 %v682, %v680
    %v805 = vpack.c.b16 %v685, %v683
    %v806 = vpack.c.b16 %v686, %v684
    %v807 = vpack.c.b16 %v689, %v687
    %v808 = vpack.c.b16 %v690, %v688
    %v809 = vpack.c.b16 %v693, %v691
    %v810 = vpack.c.b16 %v694, %v692
    %v811 = vpack.c.b16 %v697, %v695
    %v812 = vpack.c.b16 %v698, %v696
    %v813 = vpack.c.b16 %v701, %v699
    %v814 = vpack.c.b16 %v702, %v700
    %v815 = vpack.c.b16 %v705, %v703
    %v816 = vpack.c.b16 %v706, %v704
    %v817 = vpack.c.b16 %v709, %v707
    %v818 = vpack.c.b16 %v710, %v708
    %v819 = vpack.c.b16 %v713, %v711
    %v820 = vpack.c.b16 %v714, %v712
    %v821 = vpack.c.b16 %v717, %v715
    %v822 = vpack.c.b16 %v718, %v716
    %v823 = vpack.c.b16 %v721, %v719
    %v824 = vpack.c.b16 %v722, %v720
    %v825 = vpack.c.b16 %v725, %v723
    %v826 = vpack.c.b16 %v726, %v724
    %v827 = vpack.c.b16 %v729, %v727
    %v828 = vpack.c.b16 %v730, %v728
    %v829 = vpack.c.b16 %v733, %v731
    %v830 = vpack.c.b16 %v734, %v732
    %v831 = vpack.c.b16 %v737, %v735
    %v832 = vpack.c.b16 %v738, %v736
    %v833 = vpack.c.b16 %v741, %v739
    %v834 = vpack.c.b16 %v742, %v740
    %v835 = vpack.c.b16 %v745, %v743
    %v836 = vpack.c.b16 %v746, %v744
    %v837 = vpack.c.b16 %v749, %v747
    %v838 = vpack.c.b16 %v750, %v748
    %v839 = vpack.c.b16 %v753, %v751
    %v840 = vpack.c.b16 %v754, %v752
    %v841 = vpack.c.b16 %v757, %v755
    %v842 = vpack.c.b16 %v758, %v756
    %v843 = vpack.c.b16 %v761, %v759
    %v844 = vpack.c.b16 %v762, %v760
    %v845 = vpack.c.b16 %v765, %v763
    %v846 = vpack.c.b16 %v766, %v764
    %v847 = vpack.c.b16 %v769, %v767
    %v848 = vpack.c.b16 %v770, %v768
    %v849 = vpack.c.b16 %v773, %v771
    %v850 = vpack.c.b16 %v774, %v772
    %v851 = vpack.c.b16 %v777, %v775
    %v852 = vpack.c.b16 %v778, %v776
    %v853 = vpack.c.b16 %v781, %v779
    %v854 = vpack.c.b16 %v782, %v780
    %v855 = vpack.c.b16 %v785, %v783
    %v856 = vpack.c.b16 %v786, %v784
    %v857 = vpack.c.b16 %v789, %v787
    %v858 = vpack.c.b16 %v790, %v788
    %v859 = vpack.c.b16 %v793, %v791
    %v860 = vpack.c.b16 %v794, %v792
    %v861 = vpack.c.b16 %v797, %v795
    %v862 = vpack.c.b16 %v798, %v796
    %927 = vmatprep.subr.bf16.mxu0 %v814
    %928 = vmatpush1.bf16.msra.mxu0 %v813
    %929 = vmatprep.subr.bf16.mxu0 %v812
    %930 = vmatpush1.bf16.msra.mxu0 %v811
    %931 = vmatprep.subr.bf16.mxu0 %v810
    %932 = vmatpush1.bf16.msra.mxu0 %v809
    %933 = vmatprep.subr.bf16.mxu0 %v808
    %934 = vmatpush1.bf16.msra.mxu0 %v807
    %935 = vmatprep.subr.bf16.mxu0 %v806
    %936 = vmatpush1.bf16.msra.mxu0 %v805
    %937 = vmatprep.subr.bf16.mxu0 %v804
    %938 = vmatpush1.bf16.msra.mxu0 %v803
    %939 = vmatprep.subr.bf16.mxu0 %v802
    %940 = vmatpush1.bf16.msra.mxu0 %v801
    %941 = vmatprep.subr.bf16.mxu0 %v800
    %942 = vmatpush1.bf16.msra.mxu0 %v799
    %943 = vmatprep.subr.bf16.mxu0 %v830
    %944 = vmatpush2.bf16.msra.mxu0 %v829
    %945 = vmatprep.subr.bf16.mxu0 %v828
    %946 = vmatpush2.bf16.msra.mxu0 %v827
    %947 = vmatprep.subr.bf16.mxu0 %v826
    %948 = vmatpush2.bf16.msra.mxu0 %v825
    %949 = vmatprep.subr.bf16.mxu0 %v824
    %950 = vmatpush2.bf16.msra.mxu0 %v823
    %951 = vmatprep.subr.bf16.mxu0 %v822
    %952 = vmatpush2.bf16.msra.mxu0 %v821
    %953 = vmatprep.subr.bf16.mxu0 %v820
    %954 = vmatpush2.bf16.msra.mxu0 %v819
    %955 = vmatprep.subr.bf16.mxu0 %v818
    %956 = vmatpush2.bf16.msra.mxu0 %v817
    %957 = vmatprep.subr.bf16.mxu0 %v816
    %958 = vmatpush2.bf16.msra.mxu0 %v815
    %959 = vmatprep.mubr.bf16.mxu0 %v528
    %960 = vmatmul.mubr.bf16.gmra.mxu0 %v527
    %v961 = vpop.f32.mrf.mxu0
    %v962 = vadd.f32 %v600, %v961
    %v963 = vpop.f32.mrf.mxu0
    %v964 = vadd.f32 %v604, %v963
    %v965 = vpop.f32.mrf.mxu0
    %v966 = vadd.f32 %v600, %v965
    %v967 = vpop.f32.mrf.mxu0
    %v968 = vadd.f32 %v604, %v967
    %969 = vdwg.mxu0
    %970 = vmatprep.subr.bf16.mxu0 %v846
    %971 = vmatpush1.bf16.msra.mxu0 %v845
    %972 = vmatprep.subr.bf16.mxu0 %v844
    %973 = vmatpush1.bf16.msra.mxu0 %v843
    %974 = vmatprep.subr.bf16.mxu0 %v842
    %975 = vmatpush1.bf16.msra.mxu0 %v841
    %976 = vmatprep.subr.bf16.mxu0 %v840
    %977 = vmatpush1.bf16.msra.mxu0 %v839
    %978 = vmatprep.subr.bf16.mxu0 %v838
    %979 = vmatpush1.bf16.msra.mxu0 %v837
    %980 = vmatprep.subr.bf16.mxu0 %v836
    %981 = vmatpush1.bf16.msra.mxu0 %v835
    %982 = vmatprep.subr.bf16.mxu0 %v834
    %983 = vmatpush1.bf16.msra.mxu0 %v833
    %984 = vmatprep.subr.bf16.mxu0 %v832
    %985 = vmatpush1.bf16.msra.mxu0 %v831
    %986 = vmatprep.subr.bf16.mxu0 %v862
    %987 = vmatpush2.bf16.msra.mxu0 %v861
    %988 = vmatprep.subr.bf16.mxu0 %v860
    %989 = vmatpush2.bf16.msra.mxu0 %v859
    %990 = vmatprep.subr.bf16.mxu0 %v858
    %991 = vmatpush2.bf16.msra.mxu0 %v857
    %992 = vmatprep.subr.bf16.mxu0 %v856
    %993 = vmatpush2.bf16.msra.mxu0 %v855
    %994 = vmatprep.subr.bf16.mxu0 %v854
    %995 = vmatpush2.bf16.msra.mxu0 %v853
    %996 = vmatprep.subr.bf16.mxu0 %v852
    %997 = vmatpush2.bf16.msra.mxu0 %v851
    %998 = vmatprep.subr.bf16.mxu0 %v850
    %999 = vmatpush2.bf16.msra.mxu0 %v849
    %1000 = vmatprep.subr.bf16.mxu0 %v848
    %1001 = vmatpush2.bf16.msra.mxu0 %v847
    %1002 = vmatprep.mubr.bf16.mxu0 %v530
    %1003 = vmatmul.mubr.bf16.gmra.mxu0 %v529
    %v1004 = vpop.f32.mrf.mxu0
    %v1005 = vadd.f32 %v962, %v1004
    %v1006 = vpop.f32.mrf.mxu0
    %v1007 = vadd.f32 %v964, %v1006
    %v1008 = vpop.f32.mrf.mxu0
    %v1009 = vadd.f32 %v966, %v1008
    %v1010 = vpop.f32.mrf.mxu0
    %v1011 = vadd.f32 %v968, %v1010
    %1012 = vdwg.mxu0
    %v1013 = vadd.f32 %v21, %v1005
    %v1014 = vadd.f32 %v22, %v1007
    %v1015 = vadd.f32 %v23, %v1009
    %v1016 = vadd.f32 %v24, %v1011
    %1017 = vst [vmem:[#allocation2] sm:$0xff] %v1013
    %1018 = vst [vmem:[#allocation2 + $0x8] sm:$0xff] %v1014
    %1019 = vst [vmem:[#allocation2 + $0x10] sm:$0xff] %v1015
    %1020 = vst [vmem:[#allocation2 + $0x18] sm:$0xff] %v1016
    // Predicated region
    $region22: #{visual_proj.1} parent=1 // pred_check
      _
    $region23: #{visual_proj.1} parent=1 // pred_check_branch
      %1022 = sbr.rel (0) target = $region25
    $region24: #{visual_proj.1} parent=1 // pred_region
      %s1024 = ssub.s32 512, 512
      %1025 = vsyncadd [#allocation3], %s1024
      %s1026 = sshll.u32 [#allocation2], 4
      %s1027 = int_to_ptr.vmem [resolvable:$true] %s1026
      %1032 = dma.vmem_to_hbm [thread:$0]  %s1027, 512, %s5, [#allocation3], 256, 256, 16
    $region25: #{visual_proj.1} parent=1 // pred_fallthru
      _
    // Predicated region
    $region26: #{visual_proj.1} parent=1 // pred_check
      _
    $region27: #{visual_proj.1} parent=1 // pred_check_branch
      %1034 = sbr.rel (0) target = $region29
    $region28: #{visual_proj.1} parent=1 // pred_region
      %1035 = dma.done [#allocation3], 512
    $region29: #{visual_proj.1} parent=1 // pred_fallthru
      _
    %1036 = vsyncpa [#allocation3], 1

</llo_original>
